<compile_context>
chip_gen: v7x
topology: tpu7x:2x2x1
jax: 0.10.0
libtpu: 0.0.40
codegen_flags: <defaults>
</compile_context>

<pallas_src>
import functools

import jax
import jax.numpy as jnp
from jax.experimental import pallas as pl
from jax.experimental.pallas import tpu as pltpu


def _gemma_rmsnorm_kernel(x_ref, w_ref, o_ref, *, eps: float):
    # x_ref: (tm, D) tile of rows, w_ref: (1, D) fp32 (1 + weight), o_ref: (tm, D)
    x = x_ref[...].astype(jnp.float32)
    ms = jnp.mean(x * x, axis=-1, keepdims=True)            # mean(x^2) over hidden
    inv = jax.lax.rsqrt(ms + eps)
    o_ref[...] = (x * inv * w_ref[...]).astype(o_ref.dtype)  # Gemma: cast (x*w) back


def _round_up(x: int, m: int) -> int:
    return ((x + m - 1) // m) * m


def _vmem_budget_and_limit():
    """Per-generation (working-set budget, vmem_limit_bytes)."""
    cap = 64 << 20
    try:
        info = pltpu.get_tpu_info()
        cap = int(getattr(info, "vmem_capacity_bytes", cap) or cap)
    except Exception:
        pass
    if cap >= (100 << 20):
        # v5e / v6e: 128 MiB physical VMEM -> big tiles, generous scoped limit.
        return 48 << 20, 100 << 20
    # v7x (64 MiB physical): leave headroom for Mosaic scratch / bookkeeping.
    return 24 << 20, (cap * 7) // 10


def _choose_row_tile(R: int, D: int, itemsize: int, budget_bytes: int) -> int:
    """Row tile: big enough to amortize ~0.35us/step, small enough for VMEM,
    and small enough that the row grid has >=2 steps (v7x megacore)."""
    # Sublane packing granularity: 8 rows for 32-bit, 16 for bf16, 32 for 8-bit.
    row_mult = max(8, 32 // max(itemsize, 1))
    if R <= row_mult:
        # Single block whose row dim equals the full array dim (always legal).
        return R

    # Double-buffered in + out tiles plus ~2 fp32-sized fused intermediates.
    per_row_bytes = D * (4 * itemsize + 2 * 4)
    tm = budget_bytes // max(per_row_bytes, 1)
    tm = max(row_mult, (tm // row_mult) * row_mult)
    tm = min(tm, 1024)

    # Prefer 4-8 grid steps when each step still streams >= ~2 MiB of
    # input+output; always allow at least 2 steps so both v7x TCs get work
    # and prefetch/writeback can overlap.
    def step_bytes(rows: int) -> int:
        return rows * D * 2 * itemsize

    for div in (8, 4, 2):
        cand = _round_up(-(-R // div), row_mult)
        if step_bytes(cand) >= (2 << 20) or div == 2:
            tm = min(tm, cand)
            break

    tm = min(tm, _round_up(R, row_mult))
    return max(tm, row_mult)


def gemma_rmsnorm(x: jax.Array, weight: jax.Array, eps: float = 1e-6) -> jax.Array:
    """Gemma RMSNorm over the last dimension of x."""
    orig_shape = x.shape
    D = orig_shape[-1]
    x2d = x.reshape(-1, D)
    R = x2d.shape[0]
    if R == 0 or D == 0:          # degenerate shapes: nothing to normalize
        return x

    budget_bytes, vmem_limit = _vmem_budget_and_limit()
    tm = _choose_row_tile(R, D, jnp.dtype(x.dtype).itemsize, budget_bytes)
    grid = (pl.cdiv(R, tm),)      # partial last block: masked stores, no padding

    # Precompute fp32 (1 + weight) once in the wrapper.
    w2d = (1.0 + weight.astype(jnp.float32)).reshape(1, D)

    kernel = functools.partial(_gemma_rmsnorm_kernel, eps=eps)

    out2d = pl.pallas_call(
        kernel,
        out_shape=jax.ShapeDtypeStruct((R, D), x.dtype),
        grid_spec=pltpu.PrefetchScalarGridSpec(
            num_scalar_prefetch=0,
            grid=grid,
            in_specs=[
                pl.BlockSpec((tm, D), lambda i: (i, 0)),   # row tile of x
                pl.BlockSpec((1, D), lambda i: (0, 0)),    # fp32 (1 + weight)
            ],
            out_specs=pl.BlockSpec((tm, D), lambda i: (i, 0)),
        ),
        compiler_params=pltpu.CompilerParams(
            dimension_semantics=("parallel",),
            vmem_limit_bytes=vmem_limit,
        ),
    )(x2d, w2d)

    return out2d.reshape(orig_shape)


def _gemma_rmsnorm_ref(x, weight, eps=1e-6):
    xf = x.astype(jnp.float32)
    normed = xf * jax.lax.rsqrt(jnp.mean(xf * xf, axis=-1, keepdims=True) + eps)
    out = normed * (1.0 + weight.astype(jnp.float32))
    return out.astype(x.dtype)


if __name__ == "__main__":
    key = jax.random.PRNGKey(0)
    kx, kw, kx2 = jax.random.split(key, 3)

    batch, seq, hidden = 2, 8, 32
    # Input in bfloat16 to exercise the float32-compute / cast-back path.
    x = jax.random.normal(kx, (batch, seq, hidden), dtype=jnp.float32).astype(jnp.bfloat16)
    # nn.Parameter(torch.zeros(dim)) is all-zeros; use a small deterministic
    # perturbation so the (1 + weight) scaling is actually exercised.
    weight = 0.1 * jax.random.normal(kw, (hidden,), dtype=jnp.float32)

    out = gemma_rmsnorm(x, weight, eps=1e-6)
    out = jax.block_until_ready(out)

    ref = _gemma_rmsnorm_ref(x, weight, eps=1e-6)
    assert out.dtype == x.dtype, (out.dtype, x.dtype)
    assert out.shape == x.shape, (out.shape, x.shape)
    err = jnp.max(jnp.abs(out.astype(jnp.float32) - ref.astype(jnp.float32)))
    assert float(err) < 1e-2, f"max abs error {err}"

    # Second case: row count (15) not a multiple of the tile -> exercises the
    # cdiv grid with a masked partial last block, fp32 input.
    x2 = jax.random.normal(kx2, (3, 5, hidden), dtype=jnp.float32)
    out2 = jax.block_until_ready(gemma_rmsnorm(x2, weight, eps=1e-6))
    ref2 = _gemma_rmsnorm_ref(x2, weight, eps=1e-6)
    assert out2.dtype == x2.dtype and out2.shape == x2.shape
    err2 = jnp.max(jnp.abs(out2 - ref2))
    assert float(err2) < 1e-4, f"max abs error {err2}"

    print("KERNEL_OK")
</pallas_src>

<mosaic_0001>
module attributes {stable_mosaic.version = 11 : i64} {
  func.func @_gemma_rmsnorm_kernel(%arg0: i32, %arg1: memref<16x32xbf16, #tpu.memory_space<vmem>>, %arg2: memref<1x32xf32, #tpu.memory_space<vmem>>, %arg3: memref<16x32xbf16, #tpu.memory_space<vmem>>) attributes {dimension_semantics = [#tpu.dimension_semantics<parallel>], iteration_bounds = array<i64: 1>, scalar_prefetch = 0 : i64, scratch_operands = 0 : i64, tpu.core_type = #tpu.core_type<tc>, window_params = [{transform_indices = @transform_0, window_bounds = array<i64: 16, 32>}, {pipeline_mode = #tpu.pipeline_mode<synchronous>, transform_indices = @transform_1, window_bounds = array<i64: 1, 32>}, {transform_indices = @transform_2, window_bounds = array<i64: 16, 32>}]} {
    %c0 = arith.constant 0 : index
    %c0_0 = arith.constant 0 : index
    %0 = vector.load %arg1[%c0, %c0_0] : memref<16x32xbf16, #tpu.memory_space<vmem>>, vector<16x32xbf16>
    %1 = arith.extf %0 : vector<16x32xbf16> to vector<16x32xf32>
    %2 = arith.mulf %1, %1 : vector<16x32xf32>
    %cst = arith.constant dense<0.000000e+00> : vector<16xf32>
    %3 = vector.multi_reduction <add>, %2, %cst [1] : vector<16x32xf32> to vector<16xf32>
    %4 = vector.shape_cast %3 : vector<16xf32> to vector<16x1xf32>
    %cst_1 = arith.constant 3.200000e+01 : f32
    %5 = vector.broadcast %cst_1 : f32 to vector<16x1xf32>
    %6 = arith.divf %4, %5 : vector<16x1xf32>
    %cst_2 = arith.constant 9.99999997E-7 : f32
    %7 = vector.broadcast %cst_2 : f32 to vector<16x1xf32>
    %8 = arith.addf %6, %7 : vector<16x1xf32>
    %9 = math.rsqrt %8 : vector<16x1xf32>
    %10 = vector.broadcast %9 : vector<16x1xf32> to vector<16x32xf32>
    %11 = arith.mulf %1, %10 : vector<16x32xf32>
    %c0_3 = arith.constant 0 : index
    %c0_4 = arith.constant 0 : index
    %12 = vector.load %arg2[%c0_3, %c0_4] : memref<1x32xf32, #tpu.memory_space<vmem>>, vector<1x32xf32>
    %13 = vector.broadcast %12 : vector<1x32xf32> to vector<16x32xf32>
    %14 = arith.mulf %11, %13 : vector<16x32xf32>
    %15 = arith.truncf %14 : vector<16x32xf32> to vector<16x32xbf16>
    %c0_5 = arith.constant 0 : index
    %c0_6 = arith.constant 0 : index
    %16 = vector.load %arg3[%c0_5, %c0_6] : memref<16x32xbf16, #tpu.memory_space<vmem>>, vector<16x32xbf16>
    tpu.vector_store %arg3[%c0_5, %c0_6], %15 {strides = array<i32>} : memref<16x32xbf16, #tpu.memory_space<vmem>>, vector<16x32xbf16>,
    return
  }
  func.func @transform_0(%arg0: i32) -> (i32, i32) {
    %c0_i32 = arith.constant 0 : i32
    %c0_i32_0 = arith.constant 0 : i32
    return %arg0, %c0_i32 : i32, i32
  }
  func.func @transform_1(%arg0: i32) -> (i32, i32) {
    %c0_i32 = arith.constant 0 : i32
    %c0_i32_0 = arith.constant 0 : i32
    %c0_i32_1 = arith.constant 0 : i32
    return %c0_i32, %c0_i32_0 : i32, i32
  }
  func.func @transform_2(%arg0: i32) -> (i32, i32) {
    %c0_i32 = arith.constant 0 : i32
    %c0_i32_0 = arith.constant 0 : i32
    return %arg0, %c0_i32 : i32, i32
  }
}

</mosaic_0001>

<llo_original>
// kernel: tpu_custom_call.1
$region0: #{tpu_custom_call.1}
  #allocation0 [shape = 'u32[]', space=smem, size = 0x4, offset = 0x4, fixed_abs, tag = 'smem constant byte address 0x4 - core index']
  #allocation1 [shape = 'u32[144,128]{1,0:T(1,128)}', space=vmem, size = 0x12000, scoped, tag = 'internal scratch']
  %s0 = inlined_call_operand.hbm [shape: bf16[16,32], index: 0, kind: input, shape index: {}]
  %s1 = inlined_call_operand.vmem [shape: f32[1,32], index: 1, kind: input, shape index: {}]
  %s2 = inlined_call_operand.hbm [shape: bf16[16,32], index: 2, kind: output, shape index: {}]
  %s3 = sld [smem:[#allocation0]]
  $region22: #{tpu_custom_call.1} parent=0
    _
  %s5 = ssub.s32 1, %s3
  %s6 = scalar_select 0, %s5, %s3
  $region1: #{tpu_custom_call.1} parent=0
    #allocation2 [shape = 'u8[4096]{0}', space=vmem, size = 0x1000, scoped, tag = 'input window, operand 0, single buffered']
    #allocation3 [shape = 's32[1]{0}', space=sflag, size = 0x4, scoped, tag = 'scoped memory for tpu_custom_call.1']
    #allocation4 [shape = 's32[1]{0}', space=sflag, size = 0x4, scoped, tag = 'scoped memory for tpu_custom_call.1']
    #allocation5 [shape = 'u8[4096]{0}', space=vmem, size = 0x1000, scoped, tag = 'output window, operand 0, single buffered']
    %7 = vsyncpa [#allocation3], 0
    %8 = vsyncpa [#allocation4], 0
    // Predicated region
    $region2: #{tpu_custom_call.1} parent=1 // pred_check
      _
    $region3: #{tpu_custom_call.1} parent=1 // pred_check_branch
      %10 = sbr.rel (0) target = $region5
    $region4: #{tpu_custom_call.1} parent=1 // pred_region
      %s12 = ssub.s32 128, 128
      %13 = vsyncadd [#allocation3], %s12
      %s14 = sshll.u32 [#allocation2], 4
      %s15 = int_to_ptr.vmem [resolvable:$true] %s14
      %20 = dma.hbm_to_vmem [thread:$0]  %s0, 128, %s15, [#allocation3], 64, 64, 4
    $region5: #{tpu_custom_call.1} parent=1 // pred_fallthru
      _
    // Predicated region
    $region6: #{tpu_custom_call.1} parent=1 // pred_check
      _
    $region7: #{tpu_custom_call.1} parent=1 // pred_check_branch
      %22 = sbr.rel (0) target = $region9
    $region8: #{tpu_custom_call.1} parent=1 // pred_region
      _
    $region9: #{tpu_custom_call.1} parent=1 // pred_fallthru
      _
    // Predicated region
    $region10: #{tpu_custom_call.1} parent=1 // pred_check
      _
    $region11: #{tpu_custom_call.1} parent=1 // pred_check_branch
      %24 = sbr.rel (0) target = $region13
    $region12: #{tpu_custom_call.1} parent=1 // pred_region
      %25 = dma.done [#allocation3], 128
    $region13: #{tpu_custom_call.1} parent=1 // pred_fallthru
      _
    %v26 = vld [vmem:[#allocation2] sm:$0xf]
    %v27 = vld [vmem:[#allocation2 + $0x4] sm:$0xf]
    %v28 = vunpack.c.l.bf16 %v26
    %v29 = vunpack.c.l.bf16 %v27
    %v30 = vmul.f32 %v28, %v28
    %v31 = vmul.f32 %v29, %v29
    %vm32 = vcmask 261120
    %v33 = vsel %vm32, %v30, 0.0
    %34 = vadd.xlane.f32.xlu0 %v33
    %v35 = vpop.xlane.xlu0 %34
    %v36 = vsel %vm32, %v31, 0.0
    %37 = vadd.xlane.f32.xlu0 %v36
    %v38 = vpop.xlane.xlu0 %37
    %v39 = vrcp.pop 32.0
    %v40 = vmul.f32 %v35, %v39
    %v41 = vmul.f32 %v38, %v39
    %v42 = vadd.f32 %v40, 1e-06
    %v43 = vadd.f32 %v41, 1e-06
    %v44 = vrsqrt.pop %v42
    %v45 = vrsqrt.pop %v43
    %v46 = vmul.f32 %v28, %v44
    %v47 = vmul.f32 %v29, %v45
    %v48 = vld [vmem:[%s1] sm:$0x1]
    %v50 = vlaneseq
    %v51 = vshrl.u32 %v50, 7
    %v52 = vsub.s32 0, %v51
    %v53 = vrot.slane %v48, %v52
    %v55 = vmul.f32 %v46, %v53
    %v56 = vmul.f32 %v47, %v53
    %v57 = vpack.c.bf16 %v56, %v55
    %v59 = vunpack.c.l.b16 %v57
    %v60 = vunpack.c.h.b16 %v57
    %v61 = vpack.c.b16 %v59, %v59
    %v62 = vpack.c.b16 %v60, %v60
    %vm65 = vcmask 257024
    %66 = vst.msk [vmem:[#allocation5] sm:$0xf] %vm65, %v61
    %67 = vst.msk [vmem:[#allocation5 + $0x4] sm:$0xf] %vm65, %v62
    // Predicated region
    $region14: #{tpu_custom_call.1} parent=1 // pred_check
      _
    $region15: #{tpu_custom_call.1} parent=1 // pred_check_branch
      %69 = sbr.rel (0) target = $region17
    $region16: #{tpu_custom_call.1} parent=1 // pred_region
      %s71 = ssub.s32 128, 128
      %72 = vsyncadd [#allocation4], %s71
      %s73 = sshll.u32 [#allocation5], 4
      %s74 = int_to_ptr.vmem [resolvable:$true] %s73
      %79 = dma.vmem_to_hbm [thread:$0]  %s74, 128, %s2, [#allocation4], 64, 64, 4
    $region17: #{tpu_custom_call.1} parent=1 // pred_fallthru
      _
    // Predicated region
    $region18: #{tpu_custom_call.1} parent=1 // pred_check
      _
    $region19: #{tpu_custom_call.1} parent=1 // pred_check_branch
      %81 = sbr.rel (0) target = $region21
    $region20: #{tpu_custom_call.1} parent=1 // pred_region
      %82 = dma.done [#allocation4], 128
    $region21: #{tpu_custom_call.1} parent=1 // pred_fallthru
      _
    %83 = vsyncpa [#allocation3], 1
    %84 = vsyncpa [#allocation4], 1

</llo_original>
